<compile_context>
chip_gen: v5e
topology: v5e:2x2
jax: 0.10.0
libtpu: 0.0.40
codegen_flags: <defaults>
</compile_context>

<pallas_src>
import functools

import jax
import jax.numpy as jnp
from jax.experimental import pallas as pl
from jax.experimental.pallas import tpu as pltpu


def _round_up(a, b):
    return (a + b - 1) // b * b


# ----------------------- Pallas kernel -----------------------

def _mlp_fused_kernel(x_ref, w1_ref, b1_ref, w2_ref, b2_ref, o_ref):
    # fc1: bf16 operands on the MXU, f32 accumulation.
    x = x_ref[...].astype(jnp.bfloat16)
    h = jnp.dot(x, w1_ref[...], preferred_element_type=jnp.float32)
    h = h + b1_ref[...]
    # dropout (eval mode) == identity; see TODO(synk) at top of file.
    h = jnp.maximum(h, 0.0)
    # fc2: hidden stays resident in VMEM (no HBM round-trip).
    out = jnp.dot(h.astype(jnp.bfloat16), w2_ref[...],
                  preferred_element_type=jnp.float32)
    out = out + b2_ref[...]
    o_ref[...] = out.astype(o_ref.dtype)


# ----------------------- wrapper -----------------------

def _choose_m_block(M):
    """Row tile: as large as 512, multiple of 8, and >=2 grid steps when the
    batch allows it (so v7x's two TensorCores both get work)."""
    if M < 8:
        return M                      # block == full array dim (allowed)
    m_block = min(512, _round_up(M, 8))
    while m_block > 8 and (M + m_block - 1) // m_block < 2:
        m_block = max(8, _round_up(m_block // 2, 8))
    return m_block


@functools.partial(jax.jit, static_argnames=("dim_out",))
def mlp_forward(params, x, *, dim_out):
    """Matches torch: x.view(-1, C*H*W) -> fc1 -> dropout -> relu -> fc2."""
    B = x.shape[0]
    feat = x.reshape(B, -1)                      # same order as torch .view
    M, d_in = feat.shape

    w1, b1 = params["w1"], params["b1"]          # (K_pad, H_pad) bf16, (1, H_pad) f32
    w2, b2 = params["w2"], params["b2"]          # (H_pad, N_pad) bf16, (1, N_pad) f32
    K_pad, H_pad = w1.shape
    N_pad = w2.shape[1]

    # Column pad only when dim_in is not lane-aligned (no-op / no HBM copy
    # in the common case).  Zero columns are inert for matmul+bias+ReLU.
    if d_in != K_pad:
        feat = jnp.pad(feat, ((0, 0), (0, K_pad - d_in)))

    m_block = _choose_m_block(M)
    grid = (pl.cdiv(M, m_block),)                # ragged edge block is masked

    # Per-step VMEM footprint (bytes); limit is generous but v7x-safe.
    vmem_bytes = (
        2 * m_block * K_pad * 4                  # x tile, double-buffered f32
        + (K_pad * H_pad + H_pad * N_pad) * 2    # bf16 weights, single buffer
        + (H_pad + N_pad) * 4                    # f32 biases, single buffer
        + 2 * m_block * N_pad * 4                # out tile, double-buffered f32
        + m_block * (H_pad + N_pad) * 4          # in-kernel f32 temporaries
    )
    vmem_limit = int(min(64 * 1024 * 1024,
                         max(4 * vmem_bytes, 32 * 1024 * 1024)))

    out = pl.pallas_call(
        _mlp_fused_kernel,
        out_shape=jax.ShapeDtypeStruct((M, N_pad), feat.dtype),
        grid=grid,
        in_specs=[
            pl.BlockSpec((m_block, K_pad), lambda i: (i, 0)),     # x tile
            pl.BlockSpec((K_pad, H_pad), lambda i: (0, 0),        # w1 resident
                         pipeline_mode=pl.Buffered(1)),
            pl.BlockSpec((1, H_pad), lambda i: (0, 0),            # b1 resident
                         pipeline_mode=pl.Buffered(1)),
            pl.BlockSpec((H_pad, N_pad), lambda i: (0, 0),        # w2 resident
                         pipeline_mode=pl.Buffered(1)),
            pl.BlockSpec((1, N_pad), lambda i: (0, 0),            # b2 resident
                         pipeline_mode=pl.Buffered(1)),
        ],
        out_specs=pl.BlockSpec((m_block, N_pad), lambda i: (i, 0)),
        compiler_params=pltpu.CompilerParams(
            dimension_semantics=("parallel",),
            vmem_limit_bytes=vmem_limit),
    )(feat, w1, b1, w2, b2)

    return out[:, :dim_out]


# ----------------------- parameters -----------------------

def init_params(key, dim_in, dim_hidden, dim_out):
    """PyTorch-style nn.Linear init, stored pre-transposed (K, N), zero-padded
    to (8,128) multiples, weights in bfloat16 (biases stay f32)."""
    k1, k2, k3, k4 = jax.random.split(key, 4)

    def uniform(k, shape, fan_in):
        bound = 1.0 / jnp.sqrt(float(fan_in))
        return jax.random.uniform(k, shape, jnp.float32, -bound, bound)

    K_pad = _round_up(dim_in, 128)
    H_pad = _round_up(dim_hidden, 128)
    N_pad = _round_up(dim_out, 128)

    # torch weight layout is (out, in); store transposed (in, out) once here.
    w1 = uniform(k1, (dim_in, dim_hidden), dim_in)
    b1 = uniform(k2, (dim_hidden,), dim_in)
    w2 = uniform(k3, (dim_hidden, dim_out), dim_hidden)
    b2 = uniform(k4, (dim_out,), dim_hidden)

    return {
        "w1": jnp.pad(w1, ((0, K_pad - dim_in), (0, H_pad - dim_hidden))
                      ).astype(jnp.bfloat16),
        "b1": jnp.pad(b1, (0, H_pad - dim_hidden)).reshape(1, H_pad),
        "w2": jnp.pad(w2, ((0, H_pad - dim_hidden), (0, N_pad - dim_out))
                      ).astype(jnp.bfloat16),
        "b2": jnp.pad(b2, (0, N_pad - dim_out)).reshape(1, N_pad),
    }


# ----------------------- reference (pure JAX) -----------------------

def mlp_reference(params, x, dim_in, dim_hidden, dim_out):
    feat = x.reshape(x.shape[0], -1)
    w1 = params["w1"][:dim_in, :dim_hidden].astype(jnp.float32)
    b1 = params["b1"][0, :dim_hidden]
    w2 = params["w2"][:dim_hidden, :dim_out].astype(jnp.float32)
    b2 = params["b2"][0, :dim_out]
    h = jnp.maximum(jnp.dot(feat, w1, precision="highest") + b1, 0.0)
    return jnp.dot(h, w2, precision="highest") + b2


if __name__ == "__main__":
    # x: (B, C, H, W) = (2, 4, 16, 16)  ->  dim_in = 4*16*16 = 1024
    dim_in, dim_hidden, dim_out = 1024, 64, 10

    key = jax.random.PRNGKey(0)
    kp, kx = jax.random.split(key)
    params = init_params(kp, dim_in, dim_hidden, dim_out)
    x = jax.random.normal(kx, (2, 4, 16, 16), jnp.float32)

    out = mlp_forward(params, x, dim_out=dim_out)
    jax.block_until_ready(out)

    assert out.shape == (2, dim_out)
    assert bool(jnp.all(jnp.isfinite(out)))

    ref = mlp_reference(params, x, dim_in, dim_hidden, dim_out)
    max_err = float(jnp.max(jnp.abs(out - ref)))
    assert max_err < 1e-2, f"mismatch vs reference: {max_err}"

    print("KERNEL_OK")
</pallas_src>

<mosaic_0001>
module attributes {stable_mosaic.version = 11 : i64} {
  func.func @_mlp_fused_kernel(%arg0: i32, %arg1: memref<2x1024xf32, #tpu.memory_space<vmem>>, %arg2: memref<1024x128xbf16, #tpu.memory_space<vmem>>, %arg3: memref<1x128xf32, #tpu.memory_space<vmem>>, %arg4: memref<128x128xbf16, #tpu.memory_space<vmem>>, %arg5: memref<1x128xf32, #tpu.memory_space<vmem>>, %arg6: memref<2x128xf32, #tpu.memory_space<vmem>>) attributes {dimension_semantics = [#tpu.dimension_semantics<parallel>], iteration_bounds = array<i64: 1>, scalar_prefetch = 0 : i64, scratch_operands = 0 : i64, tpu.core_type = #tpu.core_type<tc>, window_params = [{transform_indices = @transform_0, window_bounds = array<i64: 2, 1024>}, {pipeline_mode = #tpu.pipeline_mode<synchronous>, transform_indices = @transform_1, window_bounds = array<i64: 1024, 128>}, {pipeline_mode = #tpu.pipeline_mode<synchronous>, transform_indices = @transform_2, window_bounds = array<i64: 1, 128>}, {pipeline_mode = #tpu.pipeline_mode<synchronous>, transform_indices = @transform_3, window_bounds = array<i64: 128, 128>}, {pipeline_mode = #tpu.pipeline_mode<synchronous>, transform_indices = @transform_4, window_bounds = array<i64: 1, 128>}, {transform_indices = @transform_5, window_bounds = array<i64: 2, 128>}]} {
    %c0 = arith.constant 0 : index
    %c0_0 = arith.constant 0 : index
    %0 = vector.load %arg1[%c0, %c0_0] : memref<2x1024xf32, #tpu.memory_space<vmem>>, vector<2x1024xf32>
    %1 = arith.truncf %0 : vector<2x1024xf32> to vector<2x1024xbf16>
    %c0_1 = arith.constant 0 : index
    %c0_2 = arith.constant 0 : index
    %2 = vector.load %arg2[%c0_1, %c0_2] : memref<1024x128xbf16, #tpu.memory_space<vmem>>, vector<1024x128xbf16>
    %cst = arith.constant dense<0.000000e+00> : vector<2x128xf32>
    %3 = tpu.matmul %1, %2, %cst {dimension_numbers = #tpu.dot_dimension_numbers<[1], [0], [0], [1], [0, 0, 1, 1], [], []>} : vector<2x1024xbf16>, vector<1024x128xbf16>, vector<2x128xf32> -> vector<2x128xf32>
    %c0_3 = arith.constant 0 : index
    %c0_4 = arith.constant 0 : index
    %4 = vector.load %arg3[%c0_3, %c0_4] : memref<1x128xf32, #tpu.memory_space<vmem>>, vector<1x128xf32>
    %5 = vector.broadcast %4 : vector<1x128xf32> to vector<2x128xf32>
    %6 = arith.addf %3, %5 : vector<2x128xf32>
    %cst_5 = arith.constant 0.000000e+00 : f32
    %7 = vector.broadcast %cst_5 : f32 to vector<2x128xf32>
    %8 = arith.maximumf %6, %7 : vector<2x128xf32>
    %9 = arith.truncf %8 : vector<2x128xf32> to vector<2x128xbf16>
    %c0_6 = arith.constant 0 : index
    %c0_7 = arith.constant 0 : index
    %10 = vector.load %arg4[%c0_6, %c0_7] : memref<128x128xbf16, #tpu.memory_space<vmem>>, vector<128x128xbf16>
    %cst_8 = arith.constant dense<0.000000e+00> : vector<2x128xf32>
    %11 = tpu.matmul %9, %10, %cst_8 {dimension_numbers = #tpu.dot_dimension_numbers<[1], [0], [0], [1], [0, 0, 1, 1], [], []>} : vector<2x128xbf16>, vector<128x128xbf16>, vector<2x128xf32> -> vector<2x128xf32>
    %c0_9 = arith.constant 0 : index
    %c0_10 = arith.constant 0 : index
    %12 = vector.load %arg5[%c0_9, %c0_10] : memref<1x128xf32, #tpu.memory_space<vmem>>, vector<1x128xf32>
    %13 = vector.broadcast %12 : vector<1x128xf32> to vector<2x128xf32>
    %14 = arith.addf %11, %13 : vector<2x128xf32>
    %c0_11 = arith.constant 0 : index
    %c0_12 = arith.constant 0 : index
    %15 = vector.load %arg6[%c0_11, %c0_12] : memref<2x128xf32, #tpu.memory_space<vmem>>, vector<2x128xf32>
    tpu.vector_store %arg6[%c0_11, %c0_12], %14 {strides = array<i32>} : memref<2x128xf32, #tpu.memory_space<vmem>>, vector<2x128xf32>,
    return
  }
  func.func @transform_0(%arg0: i32) -> (i32, i32) {
    %c0_i32 = arith.constant 0 : i32
    %c0_i32_0 = arith.constant 0 : i32
    return %arg0, %c0_i32 : i32, i32
  }
  func.func @transform_1(%arg0: i32) -> (i32, i32) {
    %c0_i32 = arith.constant 0 : i32
    %c0_i32_0 = arith.constant 0 : i32
    %c0_i32_1 = arith.constant 0 : i32
    return %c0_i32, %c0_i32_0 : i32, i32
  }
  func.func @transform_2(%arg0: i32) -> (i32, i32) {
    %c0_i32 = arith.constant 0 : i32
    %c0_i32_0 = arith.constant 0 : i32
    %c0_i32_1 = arith.constant 0 : i32
    return %c0_i32, %c0_i32_0 : i32, i32
  }
  func.func @transform_3(%arg0: i32) -> (i32, i32) {
    %c0_i32 = arith.constant 0 : i32
    %c0_i32_0 = arith.constant 0 : i32
    %c0_i32_1 = arith.constant 0 : i32
    return %c0_i32, %c0_i32_0 : i32, i32
  }
  func.func @transform_4(%arg0: i32) -> (i32, i32) {
    %c0_i32 = arith.constant 0 : i32
    %c0_i32_0 = arith.constant 0 : i32
    %c0_i32_1 = arith.constant 0 : i32
    return %c0_i32, %c0_i32_0 : i32, i32
  }
  func.func @transform_5(%arg0: i32) -> (i32, i32) {
    %c0_i32 = arith.constant 0 : i32
    %c0_i32_0 = arith.constant 0 : i32
    return %arg0, %c0_i32 : i32, i32
  }
}

</mosaic_0001>

<llo_original>
// kernel: mlp_forward.1
$region0: #{mlp_forward.1}
  #allocation0 [shape = 'u32[]', space=smem, size = 0x4, offset = 0x4, fixed_abs, tag = 'smem constant byte address 0x4 - core index']
  #allocation1 [shape = 'u32[72,128]{1,0:T(1,128)}', space=vmem, size = 0x9000, scoped, tag = 'internal scratch']
  %s0 = inlined_call_operand.vmem [shape: f32[2,1024], index: 0, kind: input, shape index: {}]
  %s1 = inlined_call_operand.hbm [shape: bf16[1024,128], index: 1, kind: input, shape index: {}]
  %s2 = inlined_call_operand.vmem [shape: f32[1,128], index: 2, kind: input, shape index: {}]
  %s3 = inlined_call_operand.vmem [shape: bf16[128,128], index: 3, kind: input, shape index: {}]
  %s4 = inlined_call_operand.vmem [shape: f32[1,128], index: 4, kind: input, shape index: {}]
  %s5 = inlined_call_operand.hbm [shape: f32[2,128], index: 5, kind: output, shape index: {}]
  %s6 = sld [smem:[#allocation0]]
  $region34: #{mlp_forward.1} parent=0
    _
  %s8 = ssub.s32 1, %s6
  %s9 = scalar_select 0, %s8, %s6
  $region1: #{mlp_forward.1} parent=0
    #allocation2 [shape = 'u8[262144]{0}', space=vmem, size = 0x40000, scoped, tag = 'input window, operand 1, single buffered']
    #allocation3 [shape = 's32[1]{0}', space=sflag, size = 0x4, scoped, tag = 'scoped memory for mlp_forward.1']
    #allocation4 [shape = 's32[1]{0}', space=sflag, size = 0x4, scoped, tag = 'scoped memory for mlp_forward.1']
    #allocation5 [shape = 'u8[1024]{0}', space=vmem, size = 0x400, scoped, tag = 'output window, operand 0, single buffered']
    %10 = vsyncpa [#allocation3], 0
    %11 = vsyncpa [#allocation4], 0
    // Predicated region
    $region2: #{mlp_forward.1} parent=1 // pred_check
      _
    $region3: #{mlp_forward.1} parent=1 // pred_check_branch
      %13 = sbr.rel (0) target = $region5
    $region4: #{mlp_forward.1} parent=1 // pred_region
      _
    $region5: #{mlp_forward.1} parent=1 // pred_fallthru
      _
    // Predicated region
    $region6: #{mlp_forward.1} parent=1 // pred_check
      _
    $region7: #{mlp_forward.1} parent=1 // pred_check_branch
      %15 = sbr.rel (0) target = $region9
    $region8: #{mlp_forward.1} parent=1 // pred_region
      %17 = vsyncadd [#allocation3], 0
      %s18 = sshll.u32 %s1, 4
      %s19 = int_to_ptr.hbm [resolvable:$true] %s18
      %s20 = sshll.u32 [#allocation2], 4
      %s21 = int_to_ptr.vmem [resolvable:$true] %s20
      %26 = dma.hbm_to_vmem [thread:$0]  %s19, 8192, %s21, [#allocation3], 64, 64, 4
    $region9: #{mlp_forward.1} parent=1 // pred_fallthru
      _
    // Predicated region
    $region10: #{mlp_forward.1} parent=1 // pred_check
      _
    $region11: #{mlp_forward.1} parent=1 // pred_check_branch
      %28 = sbr.rel (0) target = $region13
    $region12: #{mlp_forward.1} parent=1 // pred_region
      _
    $region13: #{mlp_forward.1} parent=1 // pred_fallthru
      _
    // Predicated region
    $region14: #{mlp_forward.1} parent=1 // pred_check
      _
    $region15: #{mlp_forward.1} parent=1 // pred_check_branch
      %30 = sbr.rel (0) target = $region17
    $region16: #{mlp_forward.1} parent=1 // pred_region
      _
    $region17: #{mlp_forward.1} parent=1 // pred_fallthru
      _
    // Predicated region
    $region18: #{mlp_forward.1} parent=1 // pred_check
      _
    $region19: #{mlp_forward.1} parent=1 // pred_check_branch
      %32 = sbr.rel (0) target = $region21
    $region20: #{mlp_forward.1} parent=1 // pred_region
      _
    $region21: #{mlp_forward.1} parent=1 // pred_fallthru
      _
    // Predicated region
    $region22: #{mlp_forward.1} parent=1 // pred_check
      _
    $region23: #{mlp_forward.1} parent=1 // pred_check_branch
      %34 = sbr.rel (0) target = $region25
    $region24: #{mlp_forward.1} parent=1 // pred_region
      %36 = dma.done [#allocation3], 8192
    $region25: #{mlp_forward.1} parent=1 // pred_fallthru
      _
    %v37 = vld [vmem:[%s0] sm:$0xff]
    %v38 = vld [vmem:[%s0 + $0x8] sm:$0xff]
    %41 = vst [vmem:[#allocation1] ss:$4 sm:$0xff] %v37
    %s42 = scalar_lea.vmem [#allocation1], 32
    %43 = vst [vmem:[%s42] ss:$4 sm:$0xff] %v38
    %v44 = vld.sshfl [vmem:[#allocation1] sm:$0xff pattern:$0x73625140]
    %v45 = vld.sshfl [vmem:[#allocation1 + $0x8] sm:$0xff pattern:$0x73625140]
    %v46 = vld.sshfl [vmem:[#allocation1 + $0x10] sm:$0xff pattern:$0x73625140]
    %v47 = vld.sshfl [vmem:[#allocation1 + $0x18] sm:$0xff pattern:$0x73625140]
    %v48 = vld.sshfl [vmem:[#allocation1 + $0x20] sm:$0xff pattern:$0x73625140]
    %v49 = vld.sshfl [vmem:[#allocation1 + $0x28] sm:$0xff pattern:$0x73625140]
    %v50 = vld.sshfl [vmem:[#allocation1 + $0x30] sm:$0xff pattern:$0x73625140]
    %v51 = vld.sshfl [vmem:[#allocation1 + $0x38] sm:$0xff pattern:$0x73625140]
    %v60 = vpack.c.bf16 %v44, %v44
    %v61 = vpack.c.bf16 %v45, %v45
    %v62 = vpack.c.bf16 %v46, %v46
    %v63 = vpack.c.bf16 %v47, %v47
    %v64 = vpack.c.bf16 %v48, %v48
    %v65 = vpack.c.bf16 %v49, %v49
    %v66 = vpack.c.bf16 %v50, %v50
    %v67 = vpack.c.bf16 %v51, %v51
    %v68 = vld [vmem:[#allocation2] sm:$0xf]
    %v69 = vld [vmem:[#allocation2 + $0x4] sm:$0xf]
    %v70 = vld [vmem:[#allocation2 + $0x8] sm:$0xf]
    %v71 = vld [vmem:[#allocation2 + $0xc] sm:$0xf]
    %v72 = vld [vmem:[#allocation2 + $0x10] sm:$0xf]
    %v73 = vld [vmem:[#allocation2 + $0x14] sm:$0xf]
    %v74 = vld [vmem:[#allocation2 + $0x18] sm:$0xf]
    %v75 = vld [vmem:[#allocation2 + $0x1c] sm:$0xf]
    %v76 = vld [vmem:[#allocation2 + $0x20] sm:$0xf]
    %v77 = vld [vmem:[#allocation2 + $0x24] sm:$0xf]
    %v78 = vld [vmem:[#allocation2 + $0x28] sm:$0xf]
    %v79 = vld [vmem:[#allocation2 + $0x2c] sm:$0xf]
    %v80 = vld [vmem:[#allocation2 + $0x30] sm:$0xf]
    %v81 = vld [vmem:[#allocation2 + $0x34] sm:$0xf]
    %v82 = vld [vmem:[#allocation2 + $0x38] sm:$0xf]
    %v83 = vld [vmem:[#allocation2 + $0x3c] sm:$0xf]
    %v84 = vld [vmem:[#allocation2 + $0x40] sm:$0xf]
    %v85 = vld [vmem:[#allocation2 + $0x44] sm:$0xf]
    %v86 = vld [vmem:[#allocation2 + $0x48] sm:$0xf]
    %v87 = vld [vmem:[#allocation2 + $0x4c] sm:$0xf]
    %v88 = vld [vmem:[#allocation2 + $0x50] sm:$0xf]
    %v89 = vld [vmem:[#allocation2 + $0x54] sm:$0xf]
    %v90 = vld [vmem:[#allocation2 + $0x58] sm:$0xf]
    %v91 = vld [vmem:[#allocation2 + $0x5c] sm:$0xf]
    %v92 = vld [vmem:[#allocation2 + $0x60] sm:$0xf]
    %v93 = vld [vmem:[#allocation2 + $0x64] sm:$0xf]
    %v94 = vld [vmem:[#allocation2 + $0x68] sm:$0xf]
    %v95 = vld [vmem:[#allocation2 + $0x6c] sm:$0xf]
    %v96 = vld [vmem:[#allocation2 + $0x70] sm:$0xf]
    %v97 = vld [vmem:[#allocation2 + $0x74] sm:$0xf]
    %v98 = vld [vmem:[#allocation2 + $0x78] sm:$0xf]
    %v99 = vld [vmem:[#allocation2 + $0x7c] sm:$0xf]
    %v100 = vld [vmem:[#allocation2 + $0x80] sm:$0xf]
    %v101 = vld [vmem:[#allocation2 + $0x84] sm:$0xf]
    %v102 = vld [vmem:[#allocation2 + $0x88] sm:$0xf]
    %v103 = vld [vmem:[#allocation2 + $0x8c] sm:$0xf]
    %v104 = vld [vmem:[#allocation2 + $0x90] sm:$0xf]
    %v105 = vld [vmem:[#allocation2 + $0x94] sm:$0xf]
    %v106 = vld [vmem:[#allocation2 + $0x98] sm:$0xf]
    %v107 = vld [vmem:[#allocation2 + $0x9c] sm:$0xf]
    %v108 = vld [vmem:[#allocation2 + $0xa0] sm:$0xf]
    %v109 = vld [vmem:[#allocation2 + $0xa4] sm:$0xf]
    %v110 = vld [vmem:[#allocation2 + $0xa8] sm:$0xf]
    %v111 = vld [vmem:[#allocation2 + $0xac] sm:$0xf]
    %v112 = vld [vmem:[#allocation2 + $0xb0] sm:$0xf]
    %v113 = vld [vmem:[#allocation2 + $0xb4] sm:$0xf]
    %v114 = vld [vmem:[#allocation2 + $0xb8] sm:$0xf]
    %v115 = vld [vmem:[#allocation2 + $0xbc] sm:$0xf]
    %v116 = vld [vmem:[#allocation2 + $0xc0] sm:$0xf]
    %v117 = vld [vmem:[#allocation2 + $0xc4] sm:$0xf]
    %v118 = vld [vmem:[#allocation2 + $0xc8] sm:$0xf]
    %v119 = vld [vmem:[#allocation2 + $0xcc] sm:$0xf]
    %v120 = vld [vmem:[#allocation2 + $0xd0] sm:$0xf]
    %v121 = vld [vmem:[#allocation2 + $0xd4] sm:$0xf]
    %v122 = vld [vmem:[#allocation2 + $0xd8] sm:$0xf]
    %v123 = vld [vmem:[#allocation2 + $0xdc] sm:$0xf]
    %v124 = vld [vmem:[#allocation2 + $0xe0] sm:$0xf]
    %v125 = vld [vmem:[#allocation2 + $0xe4] sm:$0xf]
    %v126 = vld [vmem:[#allocation2 + $0xe8] sm:$0xf]
    %v127 = vld [vmem:[#allocation2 + $0xec] sm:$0xf]
    %v128 = vld [vmem:[#allocation2 + $0xf0] sm:$0xf]
    %v129 = vld [vmem:[#allocation2 + $0xf4] sm:$0xf]
    %v130 = vld [vmem:[#allocation2 + $0xf8] sm:$0xf]
    %v131 = vld [vmem:[#allocation2 + $0xfc] sm:$0xf]
    %v132 = vld [vmem:[#allocation2 + $0x100] sm:$0xf]
    %v133 = vld [vmem:[#allocation2 + $0x104] sm:$0xf]
    %v134 = vld [vmem:[#allocation2 + $0x108] sm:$0xf]
    %v135 = vld [vmem:[#allocation2 + $0x10c] sm:$0xf]
    %v136 = vld [vmem:[#allocation2 + $0x110] sm:$0xf]
    %v137 = vld [vmem:[#allocation2 + $0x114] sm:$0xf]
    %v138 = vld [vmem:[#allocation2 + $0x118] sm:$0xf]
    %v139 = vld [vmem:[#allocation2 + $0x11c] sm:$0xf]
    %v140 = vld [vmem:[#allocation2 + $0x120] sm:$0xf]
    %v141 = vld [vmem:[#allocation2 + $0x124] sm:$0xf]
    %v142 = vld [vmem:[#allocation2 + $0x128] sm:$0xf]
    %v143 = vld [vmem:[#allocation2 + $0x12c] sm:$0xf]
    %v144 = vld [vmem:[#allocation2 + $0x130] sm:$0xf]
    %v145 = vld [vmem:[#allocation2 + $0x134] sm:$0xf]
    %v146 = vld [vmem:[#allocation2 + $0x138] sm:$0xf]
    %v147 = vld [vmem:[#allocation2 + $0x13c] sm:$0xf]
    %v148 = vld [vmem:[#allocation2 + $0x140] sm:$0xf]
    %v149 = vld [vmem:[#allocation2 + $0x144] sm:$0xf]
    %v150 = vld [vmem:[#allocation2 + $0x148] sm:$0xf]
    %v151 = vld [vmem:[#allocation2 + $0x14c] sm:$0xf]
    %v152 = vld [vmem:[#allocation2 + $0x150] sm:$0xf]
    %v153 = vld [vmem:[#allocation2 + $0x154] sm:$0xf]
    %v154 = vld [vmem:[#allocation2 + $0x158] sm:$0xf]
    %v155 = vld [vmem:[#allocation2 + $0x15c] sm:$0xf]
    %v156 = vld [vmem:[#allocation2 + $0x160] sm:$0xf]
    %v157 = vld [vmem:[#allocation2 + $0x164] sm:$0xf]
    %v158 = vld [vmem:[#allocation2 + $0x168] sm:$0xf]
    %v159 = vld [vmem:[#allocation2 + $0x16c] sm:$0xf]
    %v160 = vld [vmem:[#allocation2 + $0x170] sm:$0xf]
    %v161 = vld [vmem:[#allocation2 + $0x174] sm:$0xf]
    %v162 = vld [vmem:[#allocation2 + $0x178] sm:$0xf]
    %v163 = vld [vmem:[#allocation2 + $0x17c] sm:$0xf]
    %v164 = vld [vmem:[#allocation2 + $0x180] sm:$0xf]
    %v165 = vld [vmem:[#allocation2 + $0x184] sm:$0xf]
    %v166 = vld [vmem:[#allocation2 + $0x188] sm:$0xf]
    %v167 = vld [vmem:[#allocation2 + $0x18c] sm:$0xf]
    %v168 = vld [vmem:[#allocation2 + $0x190] sm:$0xf]
    %v169 = vld [vmem:[#allocation2 + $0x194] sm:$0xf]
    %v170 = vld [vmem:[#allocation2 + $0x198] sm:$0xf]
    %v171 = vld [vmem:[#allocation2 + $0x19c] sm:$0xf]
    %v172 = vld [vmem:[#allocation2 + $0x1a0] sm:$0xf]
    %v173 = vld [vmem:[#allocation2 + $0x1a4] sm:$0xf]
    %v174 = vld [vmem:[#allocation2 + $0x1a8] sm:$0xf]
    %v175 = vld [vmem:[#allocation2 + $0x1ac] sm:$0xf]
    %v176 = vld [vmem:[#allocation2 + $0x1b0] sm:$0xf]
    %v177 = vld [vmem:[#allocation2 + $0x1b4] sm:$0xf]
    %v178 = vld [vmem:[#allocation2 + $0x1b8] sm:$0xf]
    %v179 = vld [vmem:[#allocation2 + $0x1bc] sm:$0xf]
    %v180 = vld [vmem:[#allocation2 + $0x1c0] sm:$0xf]
    %v181 = vld [vmem:[#allocation2 + $0x1c4] sm:$0xf]
    %v182 = vld [vmem:[#allocation2 + $0x1c8] sm:$0xf]
    %v183 = vld [vmem:[#allocation2 + $0x1cc] sm:$0xf]
    %v184 = vld [vmem:[#allocation2 + $0x1d0] sm:$0xf]
    %v185 = vld [vmem:[#allocation2 + $0x1d4] sm:$0xf]
    %v186 = vld [vmem:[#allocation2 + $0x1d8] sm:$0xf]
    %v187 = vld [vmem:[#allocation2 + $0x1dc] sm:$0xf]
    %v188 = vld [vmem:[#allocation2 + $0x1e0] sm:$0xf]
    %v189 = vld [vmem:[#allocation2 + $0x1e4] sm:$0xf]
    %v190 = vld [vmem:[#allocation2 + $0x1e8] sm:$0xf]
    %v191 = vld [vmem:[#allocation2 + $0x1ec] sm:$0xf]
    %v192 = vld [vmem:[#allocation2 + $0x1f0] sm:$0xf]
    %v193 = vld [vmem:[#allocation2 + $0x1f4] sm:$0xf]
    %v194 = vld [vmem:[#allocation2 + $0x1f8] sm:$0xf]
    %v195 = vld [vmem:[#allocation2 + $0x1fc] sm:$0xf]
    %v196 = vld [vmem:[%s2] sm:$0x1]
    %v198 = vperm.slane %v196, 0
    %v328 = vunpack.c.l.b16 %v68
    %v329 = vunpack.c.l.b16 %v69
    %v330 = vunpack.c.l.b16 %v70
    %v331 = vunpack.c.l.b16 %v71
    %v332 = vunpack.c.l.b16 %v72
    %v333 = vunpack.c.l.b16 %v73
    %v334 = vunpack.c.l.b16 %v74
    %v335 = vunpack.c.l.b16 %v75
    %v336 = vunpack.c.l.b16 %v76
    %v337 = vunpack.c.l.b16 %v77
    %v338 = vunpack.c.l.b16 %v78
    %v339 = vunpack.c.l.b16 %v79
    %v340 = vunpack.c.l.b16 %v80
    %v341 = vunpack.c.l.b16 %v81
    %v342 = vunpack.c.l.b16 %v82
    %v343 = vunpack.c.l.b16 %v83
    %v344 = vunpack.c.l.b16 %v84
    %v345 = vunpack.c.l.b16 %v85
    %v346 = vunpack.c.l.b16 %v86
    %v347 = vunpack.c.l.b16 %v87
    %v348 = vunpack.c.l.b16 %v88
    %v349 = vunpack.c.l.b16 %v89
    %v350 = vunpack.c.l.b16 %v90
    %v351 = vunpack.c.l.b16 %v91
    %v352 = vunpack.c.l.b16 %v92
    %v353 = vunpack.c.l.b16 %v93
    %v354 = vunpack.c.l.b16 %v94
    %v355 = vunpack.c.l.b16 %v95
    %v356 = vunpack.c.l.b16 %v96
    %v357 = vunpack.c.l.b16 %v97
    %v358 = vunpack.c.l.b16 %v98
    %v359 = vunpack.c.l.b16 %v99
    %v360 = vunpack.c.l.b16 %v100
    %v361 = vunpack.c.l.b16 %v101
    %v362 = vunpack.c.l.b16 %v102
    %v363 = vunpack.c.l.b16 %v103
    %v364 = vunpack.c.l.b16 %v104
    %v365 = vunpack.c.l.b16 %v105
    %v366 = vunpack.c.l.b16 %v106
    %v367 = vunpack.c.l.b16 %v107
    %v368 = vunpack.c.l.b16 %v108
    %v369 = vunpack.c.l.b16 %v109
    %v370 = vunpack.c.l.b16 %v110
    %v371 = vunpack.c.l.b16 %v111
    %v372 = vunpack.c.l.b16 %v112
    %v373 = vunpack.c.l.b16 %v113
    %v374 = vunpack.c.l.b16 %v114
    %v375 = vunpack.c.l.b16 %v115
    %v376 = vunpack.c.l.b16 %v116
    %v377 = vunpack.c.l.b16 %v117
    %v378 = vunpack.c.l.b16 %v118
    %v379 = vunpack.c.l.b16 %v119
    %v380 = vunpack.c.l.b16 %v120
    %v381 = vunpack.c.l.b16 %v121
    %v382 = vunpack.c.l.b16 %v122
    %v383 = vunpack.c.l.b16 %v123
    %v384 = vunpack.c.l.b16 %v124
    %v385 = vunpack.c.l.b16 %v125
    %v386 = vunpack.c.l.b16 %v126
    %v387 = vunpack.c.l.b16 %v127
    %v388 = vunpack.c.l.b16 %v128
    %v389 = vunpack.c.l.b16 %v129
    %v390 = vunpack.c.l.b16 %v130
    %v391 = vunpack.c.l.b16 %v131
    %v392 = vunpack.c.l.b16 %v132
    %v393 = vunpack.c.l.b16 %v133
    %v394 = vunpack.c.l.b16 %v134
    %v395 = vunpack.c.l.b16 %v135
    %v396 = vunpack.c.l.b16 %v136
    %v397 = vunpack.c.l.b16 %v137
    %v398 = vunpack.c.l.b16 %v138
    %v399 = vunpack.c.l.b16 %v139
    %v400 = vunpack.c.l.b16 %v140
    %v401 = vunpack.c.l.b16 %v141
    %v402 = vunpack.c.l.b16 %v142
    %v403 = vunpack.c.l.b16 %v143
    %v404 = vunpack.c.l.b16 %v144
    %v405 = vunpack.c.l.b16 %v145
    %v406 = vunpack.c.l.b16 %v146
    %v407 = vunpack.c.l.b16 %v147
    %v408 = vunpack.c.l.b16 %v148
    %v409 = vunpack.c.l.b16 %v149
    %v410 = vunpack.c.l.b16 %v150
    %v411 = vunpack.c.l.b16 %v151
    %v412 = vunpack.c.l.b16 %v152
    %v413 = vunpack.c.l.b16 %v153
    %v414 = vunpack.c.l.b16 %v154
    %v415 = vunpack.c.l.b16 %v155
    %v416 = vunpack.c.l.b16 %v156
    %v417 = vunpack.c.l.b16 %v157
    %v418 = vunpack.c.l.b16 %v158
    %v419 = vunpack.c.l.b16 %v159
    %v420 = vunpack.c.l.b16 %v160
    %v421 = vunpack.c.l.b16 %v161
    %v422 = vunpack.c.l.b16 %v162
    %v423 = vunpack.c.l.b16 %v163
    %v424 = vunpack.c.l.b16 %v164
    %v425 = vunpack.c.l.b16 %v165
    %v426 = vunpack.c.l.b16 %v166
    %v427 = vunpack.c.l.b16 %v167
    %v428 = vunpack.c.l.b16 %v168
    %v429 = vunpack.c.l.b16 %v169
    %v430 = vunpack.c.l.b16 %v170
    %v431 = vunpack.c.l.b16 %v171
    %v432 = vunpack.c.l.b16 %v172
    %v433 = vunpack.c.l.b16 %v173
    %v434 = vunpack.c.l.b16 %v174
    %v435 = vunpack.c.l.b16 %v175
    %v436 = vunpack.c.l.b16 %v176
    %v437 = vunpack.c.l.b16 %v177
    %v438 = vunpack.c.l.b16 %v178
    %v439 = vunpack.c.l.b16 %v179
    %v440 = vunpack.c.l.b16 %v180
    %v441 = vunpack.c.l.b16 %v181
    %v442 = vunpack.c.l.b16 %v182
    %v443 = vunpack.c.l.b16 %v183
    %v444 = vunpack.c.l.b16 %v184
    %v445 = vunpack.c.l.b16 %v185
    %v446 = vunpack.c.l.b16 %v186
    %v447 = vunpack.c.l.b16 %v187
    %v448 = vunpack.c.l.b16 %v188
    %v449 = vunpack.c.l.b16 %v189
    %v450 = vunpack.c.l.b16 %v190
    %v451 = vunpack.c.l.b16 %v191
    %v452 = vunpack.c.l.b16 %v192
    %v453 = vunpack.c.l.b16 %v193
    %v454 = vunpack.c.l.b16 %v194
    %v455 = vunpack.c.l.b16 %v195
    %v456 = vpack.c.b16 %v329, %v328
    %v457 = vpack.c.b16 %v331, %v330
    %v458 = vpack.c.b16 %v333, %v332
    %v459 = vpack.c.b16 %v335, %v334
    %v460 = vpack.c.b16 %v337, %v336
    %v461 = vpack.c.b16 %v339, %v338
    %v462 = vpack.c.b16 %v341, %v340
    %v463 = vpack.c.b16 %v343, %v342
    %v464 = vpack.c.b16 %v345, %v344
    %v465 = vpack.c.b16 %v347, %v346
    %v466 = vpack.c.b16 %v349, %v348
    %v467 = vpack.c.b16 %v351, %v350
    %v468 = vpack.c.b16 %v353, %v352
    %v469 = vpack.c.b16 %v355, %v354
    %v470 = vpack.c.b16 %v357, %v356
    %v471 = vpack.c.b16 %v359, %v358
    %v472 = vpack.c.b16 %v361, %v360
    %v473 = vpack.c.b16 %v363, %v362
    %v474 = vpack.c.b16 %v365, %v364
    %v475 = vpack.c.b16 %v367, %v366
    %v476 = vpack.c.b16 %v369, %v368
    %v477 = vpack.c.b16 %v371, %v370
    %v478 = vpack.c.b16 %v373, %v372
    %v479 = vpack.c.b16 %v375, %v374
    %v480 = vpack.c.b16 %v377, %v376
    %v481 = vpack.c.b16 %v379, %v378
    %v482 = vpack.c.b16 %v381, %v380
    %v483 = vpack.c.b16 %v383, %v382
    %v484 = vpack.c.b16 %v385, %v384
    %v485 = vpack.c.b16 %v387, %v386
    %v486 = vpack.c.b16 %v389, %v388
    %v487 = vpack.c.b16 %v391, %v390
    %v488 = vpack.c.b16 %v393, %v392
    %v489 = vpack.c.b16 %v395, %v394
    %v490 = vpack.c.b16 %v397, %v396
    %v491 = vpack.c.b16 %v399, %v398
    %v492 = vpack.c.b16 %v401, %v400
    %v493 = vpack.c.b16 %v403, %v402
    %v494 = vpack.c.b16 %v405, %v404
    %v495 = vpack.c.b16 %v407, %v406
    %v496 = vpack.c.b16 %v409, %v408
    %v497 = vpack.c.b16 %v411, %v410
    %v498 = vpack.c.b16 %v413, %v412
    %v499 = vpack.c.b16 %v415, %v414
    %v500 = vpack.c.b16 %v417, %v416
    %v501 = vpack.c.b16 %v419, %v418
    %v502 = vpack.c.b16 %v421, %v420
    %v503 = vpack.c.b16 %v423, %v422
    %v504 = vpack.c.b16 %v425, %v424
    %v505 = vpack.c.b16 %v427, %v426
    %v506 = vpack.c.b16 %v429, %v428
    %v507 = vpack.c.b16 %v431, %v430
    %v508 = vpack.c.b16 %v433, %v432
    %v509 = vpack.c.b16 %v435, %v434
    %v510 = vpack.c.b16 %v437, %v436
    %v511 = vpack.c.b16 %v439, %v438
    %v512 = vpack.c.b16 %v441, %v440
    %v513 = vpack.c.b16 %v443, %v442
    %v514 = vpack.c.b16 %v445, %v444
    %v515 = vpack.c.b16 %v447, %v446
    %v516 = vpack.c.b16 %v449, %v448
    %v517 = vpack.c.b16 %v451, %v450
    %v518 = vpack.c.b16 %v453, %v452
    %v519 = vpack.c.b16 %v455, %v454
    %584 = vmatpush.bf16.msra.mxu0 %v463
    %585 = vmatpush.bf16.msra.mxu0 %v462
    %586 = vmatpush.bf16.msra.mxu0 %v461
    %587 = vmatpush.bf16.msra.mxu0 %v460
    %588 = vmatpush.bf16.msra.mxu0 %v459
    %589 = vmatpush.bf16.msra.mxu0 %v458
    %590 = vmatpush.bf16.msra.mxu0 %v457
    %591 = vmatpush.bf16.msra.mxu0 %v456
    %592 = vmatmul.bf16.gmra.mxu0 %v60
    %v593 = vpop.f32.mrf.mxu0
    %v594 = vadd.f32 %v198, %v593
    %v595 = vpop.f32.mrf.mxu0
    %596 = vdwg.mxu0
    %597 = vmatpush.bf16.msra.mxu0 %v471
    %598 = vmatpush.bf16.msra.mxu0 %v470
    %599 = vmatpush.bf16.msra.mxu0 %v469
    %600 = vmatpush.bf16.msra.mxu0 %v468
    %601 = vmatpush.bf16.msra.mxu0 %v467
    %602 = vmatpush.bf16.msra.mxu0 %v466
    %603 = vmatpush.bf16.msra.mxu0 %v465
    %604 = vmatpush.bf16.msra.mxu0 %v464
    %605 = vmatmul.bf16.gmra.mxu0 %v61
    %v606 = vpop.f32.mrf.mxu0
    %v607 = vadd.f32 %v594, %v606
    %v608 = vpop.f32.mrf.mxu0
    %609 = vdwg.mxu0
    %610 = vmatpush.bf16.msra.mxu0 %v479
    %611 = vmatpush.bf16.msra.mxu0 %v478
    %612 = vmatpush.bf16.msra.mxu0 %v477
    %613 = vmatpush.bf16.msra.mxu0 %v476
    %614 = vmatpush.bf16.msra.mxu0 %v475
    %615 = vmatpush.bf16.msra.mxu0 %v474
    %616 = vmatpush.bf16.msra.mxu0 %v473
    %617 = vmatpush.bf16.msra.mxu0 %v472
    %618 = vmatmul.bf16.gmra.mxu0 %v62
    %v619 = vpop.f32.mrf.mxu0
    %v620 = vadd.f32 %v607, %v619
    %v621 = vpop.f32.mrf.mxu0
    %622 = vdwg.mxu0
    %623 = vmatpush.bf16.msra.mxu0 %v487
    %624 = vmatpush.bf16.msra.mxu0 %v486
    %625 = vmatpush.bf16.msra.mxu0 %v485
    %626 = vmatpush.bf16.msra.mxu0 %v484
    %627 = vmatpush.bf16.msra.mxu0 %v483
    %628 = vmatpush.bf16.msra.mxu0 %v482
    %629 = vmatpush.bf16.msra.mxu0 %v481
    %630 = vmatpush.bf16.msra.mxu0 %v480
    %631 = vmatmul.bf16.gmra.mxu0 %v63
    %v632 = vpop.f32.mrf.mxu0
    %v633 = vadd.f32 %v620, %v632
    %v634 = vpop.f32.mrf.mxu0
    %635 = vdwg.mxu0
    %636 = vmatpush.bf16.msra.mxu0 %v495
    %637 = vmatpush.bf16.msra.mxu0 %v494
    %638 = vmatpush.bf16.msra.mxu0 %v493
    %639 = vmatpush.bf16.msra.mxu0 %v492
    %640 = vmatpush.bf16.msra.mxu0 %v491
    %641 = vmatpush.bf16.msra.mxu0 %v490
    %642 = vmatpush.bf16.msra.mxu0 %v489
    %643 = vmatpush.bf16.msra.mxu0 %v488
    %644 = vmatmul.bf16.gmra.mxu0 %v64
    %v645 = vpop.f32.mrf.mxu0
    %v646 = vadd.f32 %v633, %v645
    %v647 = vpop.f32.mrf.mxu0
    %648 = vdwg.mxu0
    %649 = vmatpush.bf16.msra.mxu0 %v503
    %650 = vmatpush.bf16.msra.mxu0 %v502
    %651 = vmatpush.bf16.msra.mxu0 %v501
    %652 = vmatpush.bf16.msra.mxu0 %v500
    %653 = vmatpush.bf16.msra.mxu0 %v499
    %654 = vmatpush.bf16.msra.mxu0 %v498
    %655 = vmatpush.bf16.msra.mxu0 %v497
    %656 = vmatpush.bf16.msra.mxu0 %v496
    %657 = vmatmul.bf16.gmra.mxu0 %v65
    %v658 = vpop.f32.mrf.mxu0
    %v659 = vadd.f32 %v646, %v658
    %v660 = vpop.f32.mrf.mxu0
    %661 = vdwg.mxu0
    %662 = vmatpush.bf16.msra.mxu0 %v511
    %663 = vmatpush.bf16.msra.mxu0 %v510
    %664 = vmatpush.bf16.msra.mxu0 %v509
    %665 = vmatpush.bf16.msra.mxu0 %v508
    %666 = vmatpush.bf16.msra.mxu0 %v507
    %667 = vmatpush.bf16.msra.mxu0 %v506
    %668 = vmatpush.bf16.msra.mxu0 %v505
    %669 = vmatpush.bf16.msra.mxu0 %v504
    %670 = vmatmul.bf16.gmra.mxu0 %v66
    %v671 = vpop.f32.mrf.mxu0
    %v672 = vadd.f32 %v659, %v671
    %v673 = vpop.f32.mrf.mxu0
    %674 = vdwg.mxu0
    %675 = vmatpush.bf16.msra.mxu0 %v519
    %676 = vmatpush.bf16.msra.mxu0 %v518
    %677 = vmatpush.bf16.msra.mxu0 %v517
    %678 = vmatpush.bf16.msra.mxu0 %v516
    %679 = vmatpush.bf16.msra.mxu0 %v515
    %680 = vmatpush.bf16.msra.mxu0 %v514
    %681 = vmatpush.bf16.msra.mxu0 %v513
    %682 = vmatpush.bf16.msra.mxu0 %v512
    %683 = vmatmul.bf16.gmra.mxu0 %v67
    %v684 = vpop.f32.mrf.mxu0
    %v685 = vadd.f32 %v672, %v684
    %v686 = vpop.f32.mrf.mxu0
    %687 = vdwg.mxu0
    %v688 = vmax.f32 %v685, 0.0
    %v689 = vpack.c.bf16 %v688, %v688
    %v690 = vld [vmem:[%s3] sm:$0xf]
    %v691 = vld [vmem:[%s3 + $0x4] sm:$0xf]
    %v692 = vld [vmem:[%s3 + $0x8] sm:$0xf]
    %v693 = vld [vmem:[%s3 + $0xc] sm:$0xf]
    %v694 = vld [vmem:[%s3 + $0x10] sm:$0xf]
    %v695 = vld [vmem:[%s3 + $0x14] sm:$0xf]
    %v696 = vld [vmem:[%s3 + $0x18] sm:$0xf]
    %v697 = vld [vmem:[%s3 + $0x1c] sm:$0xf]
    %v698 = vld [vmem:[%s3 + $0x20] sm:$0xf]
    %v699 = vld [vmem:[%s3 + $0x24] sm:$0xf]
    %v700 = vld [vmem:[%s3 + $0x28] sm:$0xf]
    %v701 = vld [vmem:[%s3 + $0x2c] sm:$0xf]
    %v702 = vld [vmem:[%s3 + $0x30] sm:$0xf]
    %v703 = vld [vmem:[%s3 + $0x34] sm:$0xf]
    %v704 = vld [vmem:[%s3 + $0x38] sm:$0xf]
    %v705 = vld [vmem:[%s3 + $0x3c] sm:$0xf]
    %v706 = vld [vmem:[%s4] sm:$0x1]
    %v708 = vperm.slane %v706, 0
    %v726 = vunpack.c.l.b16 %v690
    %v727 = vunpack.c.l.b16 %v691
    %v728 = vunpack.c.l.b16 %v692
    %v729 = vunpack.c.l.b16 %v693
    %v730 = vunpack.c.l.b16 %v694
    %v731 = vunpack.c.l.b16 %v695
    %v732 = vunpack.c.l.b16 %v696
    %v733 = vunpack.c.l.b16 %v697
    %v734 = vunpack.c.l.b16 %v698
    %v735 = vunpack.c.l.b16 %v699
    %v736 = vunpack.c.l.b16 %v700
    %v737 = vunpack.c.l.b16 %v701
    %v738 = vunpack.c.l.b16 %v702
    %v739 = vunpack.c.l.b16 %v703
    %v740 = vunpack.c.l.b16 %v704
    %v741 = vunpack.c.l.b16 %v705
    %v742 = vpack.c.b16 %v727, %v726
    %v743 = vpack.c.b16 %v729, %v728
    %v744 = vpack.c.b16 %v731, %v730
    %v745 = vpack.c.b16 %v733, %v732
    %v746 = vpack.c.b16 %v735, %v734
    %v747 = vpack.c.b16 %v737, %v736
    %v748 = vpack.c.b16 %v739, %v738
    %v749 = vpack.c.b16 %v741, %v740
    %758 = vmatpush.bf16.msra.mxu0 %v749
    %759 = vmatpush.bf16.msra.mxu0 %v748
    %760 = vmatpush.bf16.msra.mxu0 %v747
    %761 = vmatpush.bf16.msra.mxu0 %v746
    %762 = vmatpush.bf16.msra.mxu0 %v745
    %763 = vmatpush.bf16.msra.mxu0 %v744
    %764 = vmatpush.bf16.msra.mxu0 %v743
    %765 = vmatpush.bf16.msra.mxu0 %v742
    %766 = vmatmul.bf16.gmra.mxu0 %v689
    %v767 = vpop.f32.mrf.mxu0
    %v768 = vadd.f32 %v708, %v767
    %v769 = vpop.f32.mrf.mxu0
    %770 = vdwg.mxu0
    %771 = vst [vmem:[#allocation5] sm:$0x3] %v768
    // Predicated region
    $region26: #{mlp_forward.1} parent=1 // pred_check
      _
    $region27: #{mlp_forward.1} parent=1 // pred_check_branch
      %773 = sbr.rel (0) target = $region29
    $region28: #{mlp_forward.1} parent=1 // pred_region
      %775 = vsyncadd [#allocation4], 0
      %s777 = sshll.u32 [#allocation5], 4
      %s778 = int_to_ptr.vmem [resolvable:$true] %s777
      %s779 = sshll.u32 %s5, 4
      %s780 = int_to_ptr.hbm [resolvable:$true] %s779
      %782 = dma.vmem_to_hbm [thread:$0]  %s778, 32, %s780, [#allocation4]
    $region29: #{mlp_forward.1} parent=1 // pred_fallthru
      _
    // Predicated region
    $region30: #{mlp_forward.1} parent=1 // pred_check
      _
    $region31: #{mlp_forward.1} parent=1 // pred_check_branch
      %784 = sbr.rel (0) target = $region33
    $region32: #{mlp_forward.1} parent=1 // pred_region
      %786 = dma.done [#allocation4], 32
    $region33: #{mlp_forward.1} parent=1 // pred_fallthru
      _
    %787 = vsyncpa [#allocation3], 1
    %788 = vsyncpa [#allocation4], 1

</llo_original>
